<compile_context>
chip_gen: v6e
topology: v6e:2x2x1
jax: 0.10.0
libtpu: 0.0.40
codegen_flags: <defaults>
</compile_context>

<pallas_src>
import functools
import math

import jax
import jax.numpy as jnp
from jax.experimental import pallas as pl
from jax.experimental.pallas import tpu as pltpu


def mha_kernel(x_ref, wqkv_ref, bqkv_ref, wo_ref, bo_ref, out_ref, wts_ref,
               *, num_heads):
    Bb, S, E = x_ref.shape
    Dh = E // num_heads

    # Fused QKV projection over the whole batch-block: one MXU matmul with
    # Bb*S rows.  Weights arrive pre-packed / pre-transposed / pre-scaled in
    # bf16 from the host; only the per-step activations are cast here.
    x2 = x_ref[...].reshape(Bb * S, E).astype(jnp.bfloat16)
    qkv = jnp.dot(x2, wqkv_ref[...], preferred_element_type=jnp.float32)
    qkv = (qkv + bqkv_ref[...]).reshape(Bb, S, 3 * E)           # f32

    q = qkv[..., :E].astype(jnp.bfloat16)        # (Bb, S, E), pre-scaled by 1/sqrt(Dh)
    k = qkv[..., E:2 * E].astype(jnp.bfloat16)
    v = qkv[..., 2 * E:].astype(jnp.bfloat16)

    wo = wo_ref[...]                             # (E, E) bf16, loaded once per step
    out_acc = jnp.zeros((Bb * S, E), jnp.float32)
    wts_acc = jnp.zeros((Bb, S, S), jnp.float32)

    # Static (unrolled) head loop — no extra grid steps, no concat of heads.
    for h in range(num_heads):
        sl = slice(h * Dh, (h + 1) * Dh)
        qh, kh, vh = q[..., sl], k[..., sl], v[..., sl]          # (Bb, S, Dh) bf16

        # NT-form scores: contract the last dims directly (no k transpose).
        s = jnp.einsum('bqd,bkd->bqk', qh, kh,
                       preferred_element_type=jnp.float32)       # (Bb, S, S) f32
        s = s - jnp.max(s, axis=-1, keepdims=True)
        p = jnp.exp(s)
        inv = pl.reciprocal(jnp.sum(p, axis=-1, keepdims=True), approx=True)
        p = p * inv                                              # EUP recip + VPU mul
        wts_acc = wts_acc + p

        ctx = jnp.einsum('bqk,bkd->bqd', p.astype(jnp.bfloat16), vh,
                         preferred_element_type=jnp.float32)     # (Bb, S, Dh)
        # Per-head output projection: accumulate into one f32 buffer instead
        # of concatenating Dh=... slivers and doing one big matmul at the end.
        out_acc = out_acc + jnp.dot(
            ctx.reshape(Bb * S, Dh).astype(jnp.bfloat16), wo[sl, :],
            preferred_element_type=jnp.float32)

    out_ref[...] = (out_acc + bo_ref[...]).reshape(Bb, S, E)
    wts_ref[...] = wts_acc * (1.0 / num_heads)   # head average, scaled once


def _pick_block_b(batch, seq, target_rows=256):
    """Batches per grid step: try to feed >= target_rows MXU rows per matmul
    while keeping >= 2 grid steps so v7x's two TensorCores both get work."""
    bb = max(1, min(batch, max(1, target_rows // max(seq, 1))))
    while bb > 1 and -(-batch // bb) < 2:        # keep >= 2 grid steps
        bb -= 1
    while batch % bb != 0:                       # avoid ragged blocks
        bb -= 1
    return bb


def self_attention_pallas(x, in_proj_w, in_proj_b, out_proj_w, out_proj_b,
                          num_heads):
    """x: (B, S, E) float32.  Returns (output (B, S, E), attn_weights (B, S, S))."""
    B, S, E = x.shape
    H = num_heads
    Dh = E // H
    assert Dh * H == E

    scale = 1.0 / math.sqrt(Dh)

    # Host-side weight prep (once per call, outside the grid loop):
    #   x @ w_qkv == x @ in_proj_w.T   (q|k|v packed along columns),
    # with the softmax scale folded into the Q columns / Q bias, and the weight
    # matrices cast to bf16 so per-step DMA bytes + VMEM residency are halved
    # and the kernel needs no per-step weight casts.  Biases stay f32 (tiny,
    # added to f32 accumulators).
    col_scale = jnp.concatenate([jnp.full((E,), scale, jnp.float32),
                                 jnp.ones((2 * E,), jnp.float32)])
    w_qkv = (jnp.transpose(in_proj_w) * col_scale[None, :]).astype(jnp.bfloat16)  # (E, 3E)
    b_qkv = (in_proj_b * col_scale).reshape(1, 3 * E)                             # f32
    wo_t = jnp.transpose(out_proj_w).astype(jnp.bfloat16)                         # (E, E)
    bo = out_proj_b.reshape(1, E)                                                 # f32

    Bb = _pick_block_b(B, S)
    grid = (B // Bb,)

    kernel = functools.partial(mha_kernel, num_heads=H)

    out, wts = pl.pallas_call(
        kernel,
        out_shape=(jax.ShapeDtypeStruct((B, S, E), jnp.float32),
                   jax.ShapeDtypeStruct((B, S, S), jnp.float32)),
        grid_spec=pltpu.PrefetchScalarGridSpec(
            num_scalar_prefetch=0,
            grid=grid,
            in_specs=[
                pl.BlockSpec((Bb, S, E), lambda b: (b, 0, 0)),     # x (batch block)
                pl.BlockSpec((E, 3 * E), lambda b: (0, 0)),        # packed Wqkv (bf16)
                pl.BlockSpec((1, 3 * E), lambda b: (0, 0)),        # packed bqkv (f32)
                pl.BlockSpec((E, E), lambda b: (0, 0)),            # Wout^T (bf16)
                pl.BlockSpec((1, E), lambda b: (0, 0)),            # bout (f32)
            ],
            out_specs=[
                pl.BlockSpec((Bb, S, E), lambda b: (b, 0, 0)),     # output
                pl.BlockSpec((Bb, S, S), lambda b: (b, 0, 0)),     # head-avg attn weights
            ],
        ),
        # Default scoped-VMEM limits comfortably hold these blocks; at large E
        # set vmem_limit_bytes and single-buffer the constant-index weight specs.
        compiler_params=pltpu.CompilerParams(
            dimension_semantics=("parallel",)),
    )(x, w_qkv, b_qkv, wo_t, bo)
    return out, wts


def mha_reference(x, in_proj_w, in_proj_b, out_proj_w, out_proj_b, num_heads):
    """Pure-JAX reference reproducing nn.MultiheadAttention forward (q=k=v=x)."""
    B, S, E = x.shape
    H = num_heads
    Dh = E // H
    qkv = x @ in_proj_w.T + in_proj_b                 # (B, S, 3E)
    q, k, v = jnp.split(qkv, 3, axis=-1)

    def heads(t):
        return t.reshape(B, S, H, Dh).transpose(0, 2, 1, 3)   # (B, H, S, Dh)

    q, k, v = heads(q), heads(k), heads(v)
    s = jnp.einsum('bhqd,bhkd->bhqk', q, k) / math.sqrt(Dh)
    p = jax.nn.softmax(s, axis=-1)
    o = jnp.einsum('bhqk,bhkd->bhqd', p, v)
    o = o.transpose(0, 2, 1, 3).reshape(B, S, E)
    out = o @ out_proj_w.T + out_proj_b
    wts = p.mean(axis=1)                              # average_attn_weights=True
    return out, wts


if __name__ == "__main__":
    B, S, E, H = 2, 8, 32, 4   # batch, seq, hidden, heads

    key = jax.random.PRNGKey(0)
    kx, k1, k2, k3 = jax.random.split(key, 4)

    x = jax.random.normal(kx, (B, S, E), jnp.float32)

    # Deterministic parameter init (same shapes as nn.MultiheadAttention).
    in_proj_w = jax.random.normal(k1, (3 * E, E), jnp.float32) * (1.0 / math.sqrt(E))
    in_proj_b = jax.random.normal(k2, (3 * E,), jnp.float32) * 0.02
    out_proj_w = jax.random.normal(k3, (E, E), jnp.float32) * (1.0 / math.sqrt(E))
    out_proj_b = jnp.zeros((E,), jnp.float32)

    out, wts = self_attention_pallas(x, in_proj_w, in_proj_b, out_proj_w, out_proj_b, H)
    out = jax.block_until_ready(out)
    wts = jax.block_until_ready(wts)

    out_ref, wts_ref = mha_reference(x, in_proj_w, in_proj_b, out_proj_w, out_proj_b, H)

    assert out.shape == (B, S, E) and wts.shape == (B, S, S)
    # bf16 MXU inputs (f32 accumulation) + approx reciprocal -> ~0.5% relative error.
    assert jnp.allclose(out, out_ref, atol=3e-2, rtol=3e-2)
    assert jnp.allclose(wts, wts_ref, atol=1e-2, rtol=1e-2)

    print("KERNEL_OK")
</pallas_src>

<mosaic_0001>
module attributes {stable_mosaic.version = 11 : i64} {
  func.func @mha_kernel(%arg0: i32, %arg1: memref<1x8x32xf32, #tpu.memory_space<vmem>>, %arg2: memref<32x96xbf16, #tpu.memory_space<vmem>>, %arg3: memref<1x96xf32, #tpu.memory_space<vmem>>, %arg4: memref<32x32xbf16, #tpu.memory_space<vmem>>, %arg5: memref<1x32xf32, #tpu.memory_space<vmem>>, %arg6: memref<1x8x32xf32, #tpu.memory_space<vmem>>, %arg7: memref<1x8x8xf32, #tpu.memory_space<vmem>>) attributes {dimension_semantics = [#tpu.dimension_semantics<parallel>], iteration_bounds = array<i64: 2>, scalar_prefetch = 0 : i64, scratch_operands = 0 : i64, tpu.core_type = #tpu.core_type<tc>, window_params = [{transform_indices = @transform_0, window_bounds = array<i64: 1, 8, 32>}, {pipeline_mode = #tpu.pipeline_mode<synchronous>, transform_indices = @transform_1, window_bounds = array<i64: 32, 96>}, {pipeline_mode = #tpu.pipeline_mode<synchronous>, transform_indices = @transform_2, window_bounds = array<i64: 1, 96>}, {pipeline_mode = #tpu.pipeline_mode<synchronous>, transform_indices = @transform_3, window_bounds = array<i64: 32, 32>}, {pipeline_mode = #tpu.pipeline_mode<synchronous>, transform_indices = @transform_4, window_bounds = array<i64: 1, 32>}, {transform_indices = @transform_5, window_bounds = array<i64: 1, 8, 32>}, {transform_indices = @transform_6, window_bounds = array<i64: 1, 8, 8>}]} {
    %c0 = arith.constant 0 : index
    %c0_0 = arith.constant 0 : index
    %c0_1 = arith.constant 0 : index
    %0 = vector.load %arg1[%c0, %c0_0, %c0_1] : memref<1x8x32xf32, #tpu.memory_space<vmem>>, vector<1x8x32xf32>
    %1 = vector.shape_cast %0 : vector<1x8x32xf32> to vector<8x32xf32>
    %2 = arith.truncf %1 : vector<8x32xf32> to vector<8x32xbf16>
    %c0_2 = arith.constant 0 : index
    %c0_3 = arith.constant 0 : index
    %3 = vector.load %arg2[%c0_2, %c0_3] : memref<32x96xbf16, #tpu.memory_space<vmem>>, vector<32x96xbf16>
    %cst = arith.constant dense<0.000000e+00> : vector<8x96xf32>
    %4 = tpu.matmul %2, %3, %cst {dimension_numbers = #tpu.dot_dimension_numbers<[1], [0], [0], [1], [0, 0, 1, 1], [], []>} : vector<8x32xbf16>, vector<32x96xbf16>, vector<8x96xf32> -> vector<8x96xf32>
    %c0_4 = arith.constant 0 : index
    %c0_5 = arith.constant 0 : index
    %5 = vector.load %arg3[%c0_4, %c0_5] : memref<1x96xf32, #tpu.memory_space<vmem>>, vector<1x96xf32>
    %6 = vector.broadcast %5 : vector<1x96xf32> to vector<8x96xf32>
    %7 = arith.addf %4, %6 : vector<8x96xf32>
    %8 = vector.shape_cast %7 : vector<8x96xf32> to vector<1x8x96xf32>
    %9 = vector.extract_strided_slice %8 {offsets = [0, 0, 0], sizes = [1, 8, 32], strides = [1, 1, 1]} : vector<1x8x96xf32> to vector<1x8x32xf32>
    %10 = arith.truncf %9 : vector<1x8x32xf32> to vector<1x8x32xbf16>
    %11 = vector.extract_strided_slice %8 {offsets = [0, 0, 32], sizes = [1, 8, 32], strides = [1, 1, 1]} : vector<1x8x96xf32> to vector<1x8x32xf32>
    %12 = arith.truncf %11 : vector<1x8x32xf32> to vector<1x8x32xbf16>
    %13 = vector.extract_strided_slice %8 {offsets = [0, 0, 64], sizes = [1, 8, 32], strides = [1, 1, 1]} : vector<1x8x96xf32> to vector<1x8x32xf32>
    %14 = arith.truncf %13 : vector<1x8x32xf32> to vector<1x8x32xbf16>
    %c0_6 = arith.constant 0 : index
    %c0_7 = arith.constant 0 : index
    %15 = vector.load %arg4[%c0_6, %c0_7] : memref<32x32xbf16, #tpu.memory_space<vmem>>, vector<32x32xbf16>
    %cst_8 = arith.constant 0.000000e+00 : f32
    %16 = vector.broadcast %cst_8 : f32 to vector<8x32xf32>
    %cst_9 = arith.constant 0.000000e+00 : f32
    %17 = vector.broadcast %cst_9 : f32 to vector<1x8x8xf32>
    %18 = vector.extract_strided_slice %10 {offsets = [0, 0, 0], sizes = [1, 8, 8], strides = [1, 1, 1]} : vector<1x8x32xbf16> to vector<1x8x8xbf16>
    %19 = vector.extract_strided_slice %12 {offsets = [0, 0, 0], sizes = [1, 8, 8], strides = [1, 1, 1]} : vector<1x8x32xbf16> to vector<1x8x8xbf16>
    %20 = vector.extract_strided_slice %14 {offsets = [0, 0, 0], sizes = [1, 8, 8], strides = [1, 1, 1]} : vector<1x8x32xbf16> to vector<1x8x8xbf16>
    "tpu.trace_start"() <{level = 10 : i32, message = "bqd,bkd->bqk"}> : () -> ()
    %cst_10 = arith.constant dense<0.000000e+00> : vector<1x8x8xf32>
    %21 = tpu.matmul %18, %19, %cst_10 {dimension_numbers = #tpu.dot_dimension_numbers<[2], [2], [1], [1], [0, 0, 0, 1, 1, 1], [0], [0]>} : vector<1x8x8xbf16>, vector<1x8x8xbf16>, vector<1x8x8xf32> -> vector<1x8x8xf32>
    "tpu.trace_stop"() : () -> ()
    %cst_11 = arith.constant dense<0xFF800000> : vector<1x8xf32>
    %22 = vector.multi_reduction <maximumf>, %21, %cst_11 [2] : vector<1x8x8xf32> to vector<1x8xf32>
    %23 = vector.shape_cast %22 : vector<1x8xf32> to vector<1x8x1xf32>
    %24 = vector.broadcast %23 : vector<1x8x1xf32> to vector<1x8x8xf32>
    %25 = arith.subf %21, %24 : vector<1x8x8xf32>
    %26 = math.exp %25 : vector<1x8x8xf32>
    %cst_12 = arith.constant dense<0.000000e+00> : vector<1x8xf32>
    %27 = vector.multi_reduction <add>, %26, %cst_12 [2] : vector<1x8x8xf32> to vector<1x8xf32>
    %28 = vector.shape_cast %27 : vector<1x8xf32> to vector<1x8x1xf32>
    %29 = tpu.reciprocal %28 {approx = true} : vector<1x8x1xf32> -> vector<1x8x1xf32>
    %30 = vector.broadcast %29 : vector<1x8x1xf32> to vector<1x8x8xf32>
    %31 = arith.mulf %26, %30 : vector<1x8x8xf32>
    %32 = arith.addf %17, %31 : vector<1x8x8xf32>
    %33 = arith.truncf %31 : vector<1x8x8xf32> to vector<1x8x8xbf16>
    "tpu.trace_start"() <{level = 10 : i32, message = "bqk,bkd->bqd"}> : () -> ()
    %cst_13 = arith.constant dense<0.000000e+00> : vector<1x8x8xf32>
    %34 = tpu.matmul %33, %20, %cst_13 {dimension_numbers = #tpu.dot_dimension_numbers<[2], [1], [1], [2], [0, 0, 0, 1, 1, 2], [0], [0]>} : vector<1x8x8xbf16>, vector<1x8x8xbf16>, vector<1x8x8xf32> -> vector<1x8x8xf32>
    "tpu.trace_stop"() : () -> ()
    %35 = vector.shape_cast %34 : vector<1x8x8xf32> to vector<8x8xf32>
    %36 = arith.truncf %35 : vector<8x8xf32> to vector<8x8xbf16>
    %37 = vector.extract_strided_slice %15 {offsets = [0, 0], sizes = [8, 32], strides = [1, 1]} : vector<32x32xbf16> to vector<8x32xbf16>
    %cst_14 = arith.constant dense<0.000000e+00> : vector<8x32xf32>
    %38 = tpu.matmul %36, %37, %cst_14 {dimension_numbers = #tpu.dot_dimension_numbers<[1], [0], [0], [1], [0, 0, 1, 1], [], []>} : vector<8x8xbf16>, vector<8x32xbf16>, vector<8x32xf32> -> vector<8x32xf32>
    %39 = arith.addf %16, %38 : vector<8x32xf32>
    %40 = vector.extract_strided_slice %10 {offsets = [0, 0, 8], sizes = [1, 8, 8], strides = [1, 1, 1]} : vector<1x8x32xbf16> to vector<1x8x8xbf16>
    %41 = vector.extract_strided_slice %12 {offsets = [0, 0, 8], sizes = [1, 8, 8], strides = [1, 1, 1]} : vector<1x8x32xbf16> to vector<1x8x8xbf16>
    %42 = vector.extract_strided_slice %14 {offsets = [0, 0, 8], sizes = [1, 8, 8], strides = [1, 1, 1]} : vector<1x8x32xbf16> to vector<1x8x8xbf16>
    "tpu.trace_start"() <{level = 10 : i32, message = "bqd,bkd->bqk"}> : () -> ()
    %cst_15 = arith.constant dense<0.000000e+00> : vector<1x8x8xf32>
    %43 = tpu.matmul %40, %41, %cst_15 {dimension_numbers = #tpu.dot_dimension_numbers<[2], [2], [1], [1], [0, 0, 0, 1, 1, 1], [0], [0]>} : vector<1x8x8xbf16>, vector<1x8x8xbf16>, vector<1x8x8xf32> -> vector<1x8x8xf32>
    "tpu.trace_stop"() : () -> ()
    %cst_16 = arith.constant dense<0xFF800000> : vector<1x8xf32>
    %44 = vector.multi_reduction <maximumf>, %43, %cst_16 [2] : vector<1x8x8xf32> to vector<1x8xf32>
    %45 = vector.shape_cast %44 : vector<1x8xf32> to vector<1x8x1xf32>
    %46 = vector.broadcast %45 : vector<1x8x1xf32> to vector<1x8x8xf32>
    %47 = arith.subf %43, %46 : vector<1x8x8xf32>
    %48 = math.exp %47 : vector<1x8x8xf32>
    %cst_17 = arith.constant dense<0.000000e+00> : vector<1x8xf32>
    %49 = vector.multi_reduction <add>, %48, %cst_17 [2] : vector<1x8x8xf32> to vector<1x8xf32>
    %50 = vector.shape_cast %49 : vector<1x8xf32> to vector<1x8x1xf32>
    %51 = tpu.reciprocal %50 {approx = true} : vector<1x8x1xf32> -> vector<1x8x1xf32>
    %52 = vector.broadcast %51 : vector<1x8x1xf32> to vector<1x8x8xf32>
    %53 = arith.mulf %48, %52 : vector<1x8x8xf32>
    %54 = arith.addf %32, %53 : vector<1x8x8xf32>
    %55 = arith.truncf %53 : vector<1x8x8xf32> to vector<1x8x8xbf16>
    "tpu.trace_start"() <{level = 10 : i32, message = "bqk,bkd->bqd"}> : () -> ()
    %cst_18 = arith.constant dense<0.000000e+00> : vector<1x8x8xf32>
    %56 = tpu.matmul %55, %42, %cst_18 {dimension_numbers = #tpu.dot_dimension_numbers<[2], [1], [1], [2], [0, 0, 0, 1, 1, 2], [0], [0]>} : vector<1x8x8xbf16>, vector<1x8x8xbf16>, vector<1x8x8xf32> -> vector<1x8x8xf32>
    "tpu.trace_stop"() : () -> ()
    %57 = vector.shape_cast %56 : vector<1x8x8xf32> to vector<8x8xf32>
    %58 = arith.truncf %57 : vector<8x8xf32> to vector<8x8xbf16>
    %59 = vector.extract_strided_slice %15 {offsets = [8, 0], sizes = [8, 32], strides = [1, 1]} : vector<32x32xbf16> to vector<8x32xbf16>
    %cst_19 = arith.constant dense<0.000000e+00> : vector<8x32xf32>
    %60 = tpu.matmul %58, %59, %cst_19 {dimension_numbers = #tpu.dot_dimension_numbers<[1], [0], [0], [1], [0, 0, 1, 1], [], []>} : vector<8x8xbf16>, vector<8x32xbf16>, vector<8x32xf32> -> vector<8x32xf32>
    %61 = arith.addf %39, %60 : vector<8x32xf32>
    %62 = vector.extract_strided_slice %10 {offsets = [0, 0, 16], sizes = [1, 8, 8], strides = [1, 1, 1]} : vector<1x8x32xbf16> to vector<1x8x8xbf16>
    %63 = vector.extract_strided_slice %12 {offsets = [0, 0, 16], sizes = [1, 8, 8], strides = [1, 1, 1]} : vector<1x8x32xbf16> to vector<1x8x8xbf16>
    %64 = vector.extract_strided_slice %14 {offsets = [0, 0, 16], sizes = [1, 8, 8], strides = [1, 1, 1]} : vector<1x8x32xbf16> to vector<1x8x8xbf16>
    "tpu.trace_start"() <{level = 10 : i32, message = "bqd,bkd->bqk"}> : () -> ()
    %cst_20 = arith.constant dense<0.000000e+00> : vector<1x8x8xf32>
    %65 = tpu.matmul %62, %63, %cst_20 {dimension_numbers = #tpu.dot_dimension_numbers<[2], [2], [1], [1], [0, 0, 0, 1, 1, 1], [0], [0]>} : vector<1x8x8xbf16>, vector<1x8x8xbf16>, vector<1x8x8xf32> -> vector<1x8x8xf32>
    "tpu.trace_stop"() : () -> ()
    %cst_21 = arith.constant dense<0xFF800000> : vector<1x8xf32>
    %66 = vector.multi_reduction <maximumf>, %65, %cst_21 [2] : vector<1x8x8xf32> to vector<1x8xf32>
    %67 = vector.shape_cast %66 : vector<1x8xf32> to vector<1x8x1xf32>
    %68 = vector.broadcast %67 : vector<1x8x1xf32> to vector<1x8x8xf32>
    %69 = arith.subf %65, %68 : vector<1x8x8xf32>
    %70 = math.exp %69 : vector<1x8x8xf32>
    %cst_22 = arith.constant dense<0.000000e+00> : vector<1x8xf32>
    %71 = vector.multi_reduction <add>, %70, %cst_22 [2] : vector<1x8x8xf32> to vector<1x8xf32>
    %72 = vector.shape_cast %71 : vector<1x8xf32> to vector<1x8x1xf32>
    %73 = tpu.reciprocal %72 {approx = true} : vector<1x8x1xf32> -> vector<1x8x1xf32>
    %74 = vector.broadcast %73 : vector<1x8x1xf32> to vector<1x8x8xf32>
    %75 = arith.mulf %70, %74 : vector<1x8x8xf32>
    %76 = arith.addf %54, %75 : vector<1x8x8xf32>
    %77 = arith.truncf %75 : vector<1x8x8xf32> to vector<1x8x8xbf16>
    "tpu.trace_start"() <{level = 10 : i32, message = "bqk,bkd->bqd"}> : () -> ()
    %cst_23 = arith.constant dense<0.000000e+00> : vector<1x8x8xf32>
    %78 = tpu.matmul %77, %64, %cst_23 {dimension_numbers = #tpu.dot_dimension_numbers<[2], [1], [1], [2], [0, 0, 0, 1, 1, 2], [0], [0]>} : vector<1x8x8xbf16>, vector<1x8x8xbf16>, vector<1x8x8xf32> -> vector<1x8x8xf32>
    "tpu.trace_stop"() : () -> ()
    %79 = vector.shape_cast %78 : vector<1x8x8xf32> to vector<8x8xf32>
    %80 = arith.truncf %79 : vector<8x8xf32> to vector<8x8xbf16>
    %81 = vector.extract_strided_slice %15 {offsets = [16, 0], sizes = [8, 32], strides = [1, 1]} : vector<32x32xbf16> to vector<8x32xbf16>
    %cst_24 = arith.constant dense<0.000000e+00> : vector<8x32xf32>
    %82 = tpu.matmul %80, %81, %cst_24 {dimension_numbers = #tpu.dot_dimension_numbers<[1], [0], [0], [1], [0, 0, 1, 1], [], []>} : vector<8x8xbf16>, vector<8x32xbf16>, vector<8x32xf32> -> vector<8x32xf32>
    %83 = arith.addf %61, %82 : vector<8x32xf32>
    %84 = vector.extract_strided_slice %10 {offsets = [0, 0, 24], sizes = [1, 8, 8], strides = [1, 1, 1]} : vector<1x8x32xbf16> to vector<1x8x8xbf16>
    %85 = vector.extract_strided_slice %12 {offsets = [0, 0, 24], sizes = [1, 8, 8], strides = [1, 1, 1]} : vector<1x8x32xbf16> to vector<1x8x8xbf16>
    %86 = vector.extract_strided_slice %14 {offsets = [0, 0, 24], sizes = [1, 8, 8], strides = [1, 1, 1]} : vector<1x8x32xbf16> to vector<1x8x8xbf16>
    "tpu.trace_start"() <{level = 10 : i32, message = "bqd,bkd->bqk"}> : () -> ()
    %cst_25 = arith.constant dense<0.000000e+00> : vector<1x8x8xf32>
    %87 = tpu.matmul %84, %85, %cst_25 {dimension_numbers = #tpu.dot_dimension_numbers<[2], [2], [1], [1], [0, 0, 0, 1, 1, 1], [0], [0]>} : vector<1x8x8xbf16>, vector<1x8x8xbf16>, vector<1x8x8xf32> -> vector<1x8x8xf32>
    "tpu.trace_stop"() : () -> ()
    %cst_26 = arith.constant dense<0xFF800000> : vector<1x8xf32>
    %88 = vector.multi_reduction <maximumf>, %87, %cst_26 [2] : vector<1x8x8xf32> to vector<1x8xf32>
    %89 = vector.shape_cast %88 : vector<1x8xf32> to vector<1x8x1xf32>
    %90 = vector.broadcast %89 : vector<1x8x1xf32> to vector<1x8x8xf32>
    %91 = arith.subf %87, %90 : vector<1x8x8xf32>
    %92 = math.exp %91 : vector<1x8x8xf32>
    %cst_27 = arith.constant dense<0.000000e+00> : vector<1x8xf32>
    %93 = vector.multi_reduction <add>, %92, %cst_27 [2] : vector<1x8x8xf32> to vector<1x8xf32>
    %94 = vector.shape_cast %93 : vector<1x8xf32> to vector<1x8x1xf32>
    %95 = tpu.reciprocal %94 {approx = true} : vector<1x8x1xf32> -> vector<1x8x1xf32>
    %96 = vector.broadcast %95 : vector<1x8x1xf32> to vector<1x8x8xf32>
    %97 = arith.mulf %92, %96 : vector<1x8x8xf32>
    %98 = arith.addf %76, %97 : vector<1x8x8xf32>
    %99 = arith.truncf %97 : vector<1x8x8xf32> to vector<1x8x8xbf16>
    "tpu.trace_start"() <{level = 10 : i32, message = "bqk,bkd->bqd"}> : () -> ()
    %cst_28 = arith.constant dense<0.000000e+00> : vector<1x8x8xf32>
    %100 = tpu.matmul %99, %86, %cst_28 {dimension_numbers = #tpu.dot_dimension_numbers<[2], [1], [1], [2], [0, 0, 0, 1, 1, 2], [0], [0]>} : vector<1x8x8xbf16>, vector<1x8x8xbf16>, vector<1x8x8xf32> -> vector<1x8x8xf32>
    "tpu.trace_stop"() : () -> ()
    %101 = vector.shape_cast %100 : vector<1x8x8xf32> to vector<8x8xf32>
    %102 = arith.truncf %101 : vector<8x8xf32> to vector<8x8xbf16>
    %103 = vector.extract_strided_slice %15 {offsets = [24, 0], sizes = [8, 32], strides = [1, 1]} : vector<32x32xbf16> to vector<8x32xbf16>
    %cst_29 = arith.constant dense<0.000000e+00> : vector<8x32xf32>
    %104 = tpu.matmul %102, %103, %cst_29 {dimension_numbers = #tpu.dot_dimension_numbers<[1], [0], [0], [1], [0, 0, 1, 1], [], []>} : vector<8x8xbf16>, vector<8x32xbf16>, vector<8x32xf32> -> vector<8x32xf32>
    %105 = arith.addf %83, %104 : vector<8x32xf32>
    %c0_30 = arith.constant 0 : index
    %c0_31 = arith.constant 0 : index
    %106 = vector.load %arg5[%c0_30, %c0_31] : memref<1x32xf32, #tpu.memory_space<vmem>>, vector<1x32xf32>
    %107 = vector.broadcast %106 : vector<1x32xf32> to vector<8x32xf32>
    %108 = arith.addf %105, %107 : vector<8x32xf32>
    %109 = vector.shape_cast %108 : vector<8x32xf32> to vector<1x8x32xf32>
    %c0_32 = arith.constant 0 : index
    %c0_33 = arith.constant 0 : index
    %c0_34 = arith.constant 0 : index
    %110 = vector.load %arg6[%c0_32, %c0_33, %c0_34] : memref<1x8x32xf32, #tpu.memory_space<vmem>>, vector<1x8x32xf32>
    tpu.vector_store %arg6[%c0_32, %c0_33, %c0_34], %109 {strides = array<i32>} : memref<1x8x32xf32, #tpu.memory_space<vmem>>, vector<1x8x32xf32>,
    %cst_35 = arith.constant 2.500000e-01 : f32
    %111 = vector.broadcast %cst_35 : f32 to vector<1x8x8xf32>
    %112 = arith.mulf %98, %111 : vector<1x8x8xf32>
    %c0_36 = arith.constant 0 : index
    %c0_37 = arith.constant 0 : index
    %c0_38 = arith.constant 0 : index
    %113 = vector.load %arg7[%c0_36, %c0_37, %c0_38] : memref<1x8x8xf32, #tpu.memory_space<vmem>>, vector<1x8x8xf32>
    tpu.vector_store %arg7[%c0_36, %c0_37, %c0_38], %112 {strides = array<i32>} : memref<1x8x8xf32, #tpu.memory_space<vmem>>, vector<1x8x8xf32>,
    return
  }
  func.func @transform_0(%arg0: i32) -> (i32, i32, i32) {
    %c0_i32 = arith.constant 0 : i32
    %c0_i32_0 = arith.constant 0 : i32
    %c0_i32_1 = arith.constant 0 : i32
    return %arg0, %c0_i32, %c0_i32_0 : i32, i32, i32
  }
  func.func @transform_1(%arg0: i32) -> (i32, i32) {
    %c0_i32 = arith.constant 0 : i32
    %c0_i32_0 = arith.constant 0 : i32
    %c0_i32_1 = arith.constant 0 : i32
    return %c0_i32, %c0_i32_0 : i32, i32
  }
  func.func @transform_2(%arg0: i32) -> (i32, i32) {
    %c0_i32 = arith.constant 0 : i32
    %c0_i32_0 = arith.constant 0 : i32
    %c0_i32_1 = arith.constant 0 : i32
    return %c0_i32, %c0_i32_0 : i32, i32
  }
  func.func @transform_3(%arg0: i32) -> (i32, i32) {
    %c0_i32 = arith.constant 0 : i32
    %c0_i32_0 = arith.constant 0 : i32
    %c0_i32_1 = arith.constant 0 : i32
    return %c0_i32, %c0_i32_0 : i32, i32
  }
  func.func @transform_4(%arg0: i32) -> (i32, i32) {
    %c0_i32 = arith.constant 0 : i32
    %c0_i32_0 = arith.constant 0 : i32
    %c0_i32_1 = arith.constant 0 : i32
    return %c0_i32, %c0_i32_0 : i32, i32
  }
  func.func @transform_5(%arg0: i32) -> (i32, i32, i32) {
    %c0_i32 = arith.constant 0 : i32
    %c0_i32_0 = arith.constant 0 : i32
    %c0_i32_1 = arith.constant 0 : i32
    return %arg0, %c0_i32, %c0_i32_0 : i32, i32, i32
  }
  func.func @transform_6(%arg0: i32) -> (i32, i32, i32) {
    %c0_i32 = arith.constant 0 : i32
    %c0_i32_0 = arith.constant 0 : i32
    %c0_i32_1 = arith.constant 0 : i32
    return %arg0, %c0_i32, %c0_i32_0 : i32, i32, i32
  }
}

</mosaic_0001>

<llo_original>
// kernel: tpu_custom_call.1
$region0: #{tpu_custom_call.1}
  #allocation0 [shape = 'u32[]', space=smem, size = 0x4, offset = 0x4, fixed_abs, tag = 'smem constant byte address 0x4 - core index']
  #allocation1 [shape = 'u32[144,128]{1,0:T(1,128)}', space=vmem, size = 0x12000, scoped, tag = 'internal scratch']
  %s0 = inlined_call_operand.hbm [shape: f32[2,8,32], index: 0, kind: input, shape index: {}]
  %s1 = inlined_call_operand.hbm [shape: bf16[32,96], index: 1, kind: input, shape index: {}]
  %s2 = inlined_call_operand.vmem [shape: f32[1,96], index: 2, kind: input, shape index: {}]
  %s3 = inlined_call_operand.hbm [shape: bf16[32,32], index: 3, kind: input, shape index: {}]
  %s4 = inlined_call_operand.vmem [shape: f32[1,32], index: 4, kind: input, shape index: {}]
  %s5 = inlined_call_operand.hbm [shape: f32[2,8,32], index: 5, kind: output, shape index: {0}]
  %s6 = inlined_call_operand.hbm [shape: f32[2,8,8], index: 6, kind: output, shape index: {1}]
  %7 = xla_tuple %s5, %s6
  %s8 = sld [smem:[#allocation0]]
  $region73: #{tpu_custom_call.1} parent=0
    _
  %s10 = ssub.s32 1, %s8
  %s11 = scalar_select 0, %s10, %s8
  $region1: #{tpu_custom_call.1} parent=0
    #allocation2 [shape = 'u8[8192]{0}', space=vmem, size = 0x2000, scoped, tag = 'input window, operand 0']
    #allocation3 [shape = 's32[2]{0}', space=sflag, size = 0x8, scoped, tag = 'scoped memory for tpu_custom_call.1']
    #allocation4 [shape = 's32[2]{0}', space=sflag, size = 0x8, scoped, tag = 'scoped memory for tpu_custom_call.1']
    #allocation5 [shape = 'u8[8192]{0}', space=vmem, size = 0x2000, scoped, tag = 'input window, operand 1, single buffered']
    #allocation6 [shape = 's32[1]{0}', space=sflag, size = 0x4, scoped, tag = 'scoped memory for tpu_custom_call.1']
    #allocation7 [shape = 'u8[8192]{0}', space=vmem, size = 0x2000, scoped, tag = 'input window, operand 3, single buffered']
    #allocation8 [shape = 'u8[8192]{0}', space=vmem, size = 0x2000, scoped, tag = 'output window, operand 0']
    #allocation9 [shape = 'u8[8192]{0}', space=vmem, size = 0x2000, scoped, tag = 'output window, operand 1']
    #allocation10 [shape = 's32[2]{0}', space=sflag, size = 0x8, scoped, tag = 'scoped memory for tpu_custom_call.1']
    %12 = vsyncpa [#allocation3], 0
    %s13 = scalar_lea.sflag [#allocation3], 1
    %14 = vsyncpa %s13, 0
    %15 = vsyncpa [#allocation6], 0
    %16 = vsyncpa [#allocation4], 0
    %s17 = scalar_lea.sflag [#allocation4], 1
    %18 = vsyncpa %s17, 0
    %19 = vsyncpa [#allocation10], 0
    %s20 = scalar_lea.sflag [#allocation10], 1
    %21 = vsyncpa %s20, 0
    loop: start=0, step=1, limit=4
    $region2: #{tpu_custom_call.1} parent=1 // loop_pre_header
      _
    $region3: #{tpu_custom_call.1} parent=1 // loop_header
      %s23 = sphi 0, %s27
      %p24 = scmp.ge.s32.totalorder %s23, 4
      %s33 = sphi 0, %s35
      %s36 = sphi 0, %s33
      %s37 = sphi 0, %s36
      %s53 = sphi 0, %s37
      %s57 = sphi 0, %s57
      %s59 = sphi 0, %s57
      %s60 = sphi 0, %s59
      %s74 = sphi 0, %s60
      %s78 = sphi 0, %s78
      %s80 = sphi 0, %s78
      %s81 = sphi 0, %s80
      %s95 = sphi 0, %s81
      %s99 = sphi 0, %s99
      %s101 = sphi 0, %s99
      %s102 = sphi 0, %s101
      %s116 = sphi 0, %s102
      %s120 = sphi 0, %s120
      %s122 = sphi 0, %s120
      %s123 = sphi 0, %s122
      %s137 = sphi 0, %s123
      %s143 = sphi 0, %s145
      %s146 = sphi 0, %s143
      %s147 = sphi 0, %s146
      %s163 = sphi 0, %s147
      %s169 = sphi 0, %s171
      %s172 = sphi 0, %s169
      %s173 = sphi 0, %s172
      %s189 = sphi 0, %s173
    $region4: #{tpu_custom_call.1} parent=1 // loop_header_branch
      %26 = sbr.rel (%p24) target = $region8
    $region5: #{tpu_custom_call.1} parent=1 // loop_body
      %s28 = ssub.s32 %s23, 1
      %s29 = ssub.s32 %s23, 2
      %s30 = sadd.s32 %s23, 1
      %s31 = ssub.s32 %s23, %s30
      %p32 = scmp.eq.s32.totalorder %s31, 0
      %s34 = sadd.s32 %s33, 1
      %s35 = scalar_select %p32, %s33, %s34
      %p38 = pneg %p32
      %p39 = scmp.eq.s32.totalorder %s23, 1
      %p40 = por %p38, %p39
      %p41 = scmp.ne.s32.totalorder %s33, %s36
      %p42 = scmp.eq.s32.totalorder %s23, 0
      %p43 = por %p41, %p42
      %p44 = scmp.ne.s32.totalorder %s33, %s36
      %p45 = scmp.eq.s32.totalorder %s28, 1
      %p46 = por %p44, %p45
      %p47 = scmp.ne.s32.totalorder %s36, %s37
      %p48 = scmp.eq.s32.totalorder %s28, 0
      %p49 = por %p47, %p48
      %p50 = scmp.ne.s32.totalorder %s36, %s37
      %p51 = scmp.eq.s32.totalorder %s29, 1
      %p52 = por %p50, %p51
      %p54 = scmp.ne.s32.totalorder %s37, %s53
      %p55 = scmp.eq.s32.totalorder %s29, 0
      %p56 = por %p54, %p55
      %s58 = sadd.s32 %s57, 1
      %p61 = scmp.eq.s32.totalorder %s23, 1
      %p62 = scmp.ne.s32.totalorder %s57, %s59
      %p63 = scmp.eq.s32.totalorder %s23, 0
      %p64 = por %p62, %p63
      %p65 = scmp.ne.s32.totalorder %s57, %s59
      %p66 = scmp.eq.s32.totalorder %s28, 1
      %p67 = por %p65, %p66
      %p68 = scmp.ne.s32.totalorder %s59, %s60
      %p69 = scmp.eq.s32.totalorder %s28, 0
      %p70 = por %p68, %p69
      %p71 = scmp.ne.s32.totalorder %s59, %s60
      %p72 = scmp.eq.s32.totalorder %s29, 1
      %p73 = por %p71, %p72
      %p75 = scmp.ne.s32.totalorder %s60, %s74
      %p76 = scmp.eq.s32.totalorder %s29, 0
      %p77 = por %p75, %p76
      %s79 = sadd.s32 %s78, 1
      %p82 = scmp.eq.s32.totalorder %s23, 1
      %p83 = scmp.ne.s32.totalorder %s78, %s80
      %p84 = scmp.eq.s32.totalorder %s23, 0
      %p85 = por %p83, %p84
      %p86 = scmp.ne.s32.totalorder %s78, %s80
      %p87 = scmp.eq.s32.totalorder %s28, 1
      %p88 = por %p86, %p87
      %p89 = scmp.ne.s32.totalorder %s80, %s81
      %p90 = scmp.eq.s32.totalorder %s28, 0
      %p91 = por %p89, %p90
      %p92 = scmp.ne.s32.totalorder %s80, %s81
      %p93 = scmp.eq.s32.totalorder %s29, 1
      %p94 = por %p92, %p93
      %p96 = scmp.ne.s32.totalorder %s81, %s95
      %p97 = scmp.eq.s32.totalorder %s29, 0
      %p98 = por %p96, %p97
      %s100 = sadd.s32 %s99, 1
      %p103 = scmp.eq.s32.totalorder %s23, 1
      %p104 = scmp.ne.s32.totalorder %s99, %s101
      %p105 = scmp.eq.s32.totalorder %s23, 0
      %p106 = por %p104, %p105
      %p107 = scmp.ne.s32.totalorder %s99, %s101
      %p108 = scmp.eq.s32.totalorder %s28, 1
      %p109 = por %p107, %p108
      %p110 = scmp.ne.s32.totalorder %s101, %s102
      %p111 = scmp.eq.s32.totalorder %s28, 0
      %p112 = por %p110, %p111
      %p113 = scmp.ne.s32.totalorder %s101, %s102
      %p114 = scmp.eq.s32.totalorder %s29, 1
      %p115 = por %p113, %p114
      %p117 = scmp.ne.s32.totalorder %s102, %s116
      %p118 = scmp.eq.s32.totalorder %s29, 0
      %p119 = por %p117, %p118
      %s121 = sadd.s32 %s120, 1
      %p124 = scmp.eq.s32.totalorder %s23, 1
      %p125 = scmp.ne.s32.totalorder %s120, %s122
      %p126 = scmp.eq.s32.totalorder %s23, 0
      %p127 = por %p125, %p126
      %p128 = scmp.ne.s32.totalorder %s120, %s122
      %p129 = scmp.eq.s32.totalorder %s28, 1
      %p130 = por %p128, %p129
      %p131 = scmp.ne.s32.totalorder %s122, %s123
      %p132 = scmp.eq.s32.totalorder %s28, 0
      %p133 = por %p131, %p132
      %p134 = scmp.ne.s32.totalorder %s122, %s123
      %p135 = scmp.eq.s32.totalorder %s29, 1
      %p136 = por %p134, %p135
      %p138 = scmp.ne.s32.totalorder %s123, %s137
      %p139 = scmp.eq.s32.totalorder %s29, 0
      %p140 = por %p138, %p139
      %s141 = ssub.s32 %s23, %s30
      %p142 = scmp.eq.s32.totalorder %s141, 0
      %s144 = sadd.s32 %s143, 1
      %s145 = scalar_select %p142, %s143, %s144
      %p148 = pneg %p142
      %p149 = scmp.eq.s32.totalorder %s23, 1
      %p150 = por %p148, %p149
      %p151 = scmp.ne.s32.totalorder %s143, %s146
      %p152 = scmp.eq.s32.totalorder %s23, 0
      %p153 = por %p151, %p152
      %p154 = scmp.ne.s32.totalorder %s143, %s146
      %p155 = scmp.eq.s32.totalorder %s28, 1
      %p156 = por %p154, %p155
      %p157 = scmp.ne.s32.totalorder %s146, %s147
      %p158 = scmp.eq.s32.totalorder %s28, 0
      %p159 = por %p157, %p158
      %p160 = scmp.ne.s32.totalorder %s146, %s147
      %p161 = scmp.eq.s32.totalorder %s29, 1
      %p162 = por %p160, %p161
      %p164 = scmp.ne.s32.totalorder %s147, %s163
      %p165 = scmp.eq.s32.totalorder %s29, 0
      %p166 = por %p164, %p165
      %s167 = ssub.s32 %s23, %s30
      %p168 = scmp.eq.s32.totalorder %s167, 0
      %s170 = sadd.s32 %s169, 1
      %s171 = scalar_select %p168, %s169, %s170
      %p174 = pneg %p168
      %p175 = scmp.eq.s32.totalorder %s23, 1
      %p176 = por %p174, %p175
      %p177 = scmp.ne.s32.totalorder %s169, %s172
      %p178 = scmp.eq.s32.totalorder %s23, 0
      %p179 = por %p177, %p178
      %p180 = scmp.ne.s32.totalorder %s169, %s172
      %p181 = scmp.eq.s32.totalorder %s28, 1
      %p182 = por %p180, %p181
      %p183 = scmp.ne.s32.totalorder %s172, %s173
      %p184 = scmp.eq.s32.totalorder %s28, 0
      %p185 = por %p183, %p184
      %p186 = scmp.ne.s32.totalorder %s172, %s173
      %p187 = scmp.eq.s32.totalorder %s29, 1
      %p188 = por %p186, %p187
      %p190 = scmp.ne.s32.totalorder %s173, %s189
      %p191 = scmp.eq.s32.totalorder %s29, 0
      %p192 = por %p190, %p191
      %p193 = scmp.le.s32.totalorder 1, %s23
      %p194 = scmp.lt.s32.totalorder %s23, 3
      %p195 = pnand %p193, %p194
      %p196 = pneg %p195
      // Predicated region
      $region9: #{tpu_custom_call.1} parent=5 // pred_check
        _
      $region10: #{tpu_custom_call.1} parent=5 // pred_check_branch
        %198 = sbr.rel (%p195) target = $region12
      $region11: #{tpu_custom_call.1} parent=5 // pred_region
        %s199 = ssub.s32 %s23, 1
        // Predicated region
        $region13: #{tpu_custom_call.1} parent=11 // pred_check
          %p200 = pneg %p70
        $region14: #{tpu_custom_call.1} parent=11 // pred_check_branch
          %202 = sbr.rel (%p200) target = $region16
        $region15: #{tpu_custom_call.1} parent=11 // pred_region
          %s204 = ssub.s32 256, 256
          %205 = vsyncadd [#allocation6], %s204
          %s206 = sshll.u32 [#allocation5], 4
          %s207 = int_to_ptr.vmem [resolvable:$true] %s206
          %212 = dma.hbm_to_vmem [thread:$0]  %s1, 256, %s207, [#allocation6], 64, 64, 4
        $region16: #{tpu_custom_call.1} parent=11 // pred_fallthru
          _
        // Predicated region
        $region17: #{tpu_custom_call.1} parent=11 // pred_check
          %p213 = pneg %p91
        $region18: #{tpu_custom_call.1} parent=11 // pred_check_branch
          %215 = sbr.rel (%p213) target = $region20
        $region19: #{tpu_custom_call.1} parent=11 // pred_region
          _
        $region20: #{tpu_custom_call.1} parent=11 // pred_fallthru
          _
        // Predicated region
        $region21: #{tpu_custom_call.1} parent=11 // pred_check
          %p216 = pneg %p112
        $region22: #{tpu_custom_call.1} parent=11 // pred_check_branch
          %218 = sbr.rel (%p216) target = $region24
        $region23: #{tpu_custom_call.1} parent=11 // pred_region
          %s220 = ssub.s32 256, 256
          %221 = vsyncadd [#allocation6], %s220
          %s222 = sshll.u32 [#allocation7], 4
          %s223 = int_to_ptr.vmem [resolvable:$true] %s222
          %228 = dma.hbm_to_vmem [thread:$0]  %s3, 256, %s223, [#allocation6], 64, 64, 4
        $region24: #{tpu_custom_call.1} parent=11 // pred_fallthru
          _
        // Predicated region
        $region25: #{tpu_custom_call.1} parent=11 // pred_check
          %p229 = pneg %p133
        $region26: #{tpu_custom_call.1} parent=11 // pred_check_branch
          %231 = sbr.rel (%p229) target = $region28
        $region27: #{tpu_custom_call.1} parent=11 // pred_region
          _
        $region28: #{tpu_custom_call.1} parent=11 // pred_fallthru
          _
      $region12: #{tpu_custom_call.1} parent=5 // pred_fallthru
        _
      %p232 = scmp.lt.s32.totalorder %s23, 2
      // Predicated region
      $region29: #{tpu_custom_call.1} parent=5 // pred_check
        %p233 = pneg %p232
      $region30: #{tpu_custom_call.1} parent=5 // pred_check_branch
        %235 = sbr.rel (%p233) target = $region32
      $region31: #{tpu_custom_call.1} parent=5 // pred_region
        // Predicated region
        $region33: #{tpu_custom_call.1} parent=31 // pred_check
          %p236 = pneg %p43
        $region34: #{tpu_custom_call.1} parent=31 // pred_check_branch
          %238 = sbr.rel (%p236) target = $region36
        $region35: #{tpu_custom_call.1} parent=31 // pred_region
          %s239 = sand.u32 %s33, 1
          %s240 = scalar_lea.sflag [#allocation3], %s239
          %s241 = sand.u32 %s33, 1
          %s242 = smul.addr %s241, 8
          %s243 = scalar_lea.vmem [#allocation2], %s242
          %s245 = ssub.s32 128, 128
          %246 = vsyncadd %s240, %s245
          %s247 = smul.addr %s23, 128
          %s248 = scalar_lea.hbm %s0, %s247
          %s250 = sshll.u32 %s243, 4
          %s251 = int_to_ptr.vmem [resolvable:$true] %s250
          %253 = dma.hbm_to_vmem [thread:$0]  %s248, 128, %s251, %s240
        $region36: #{tpu_custom_call.1} parent=31 // pred_fallthru
          _
      $region32: #{tpu_custom_call.1} parent=5 // pred_fallthru
        _
      %p254 = scmp.le.s32.totalorder 1, %s23
      %p255 = scmp.lt.s32.totalorder %s23, 3
      %p256 = pnand %p254, %p255
      %p257 = pneg %p256
      // Predicated region
      $region37: #{tpu_custom_call.1} parent=5 // pred_check
        _
      $region38: #{tpu_custom_call.1} parent=5 // pred_check_branch
        %259 = sbr.rel (%p256) target = $region40
      $region39: #{tpu_custom_call.1} parent=5 // pred_region
        %s260 = ssub.s32 %s23, 1
        %s261 = sand.u32 %s36, 1
        %s262 = scalar_lea.sflag [#allocation3], %s261
        %s263 = sand.u32 %s36, 1
        %s264 = smul.addr %s263, 8
        %s265 = scalar_lea.vmem [#allocation2], %s264
        // Predicated region
        $region41: #{tpu_custom_call.1} parent=39 // pred_check
          %p266 = pneg %p49
        $region42: #{tpu_custom_call.1} parent=39 // pred_check_branch
          %268 = sbr.rel (%p266) target = $region44
        $region43: #{tpu_custom_call.1} parent=39 // pred_region
          %269 = dma.done %s262, 128
        $region44: #{tpu_custom_call.1} parent=39 // pred_fallthru
          _
        // Predicated region
        $region45: #{tpu_custom_call.1} parent=39 // pred_check
          %p270 = pneg %p70
        $region46: #{tpu_custom_call.1} parent=39 // pred_check_branch
          %272 = sbr.rel (%p270) target = $region48
        $region47: #{tpu_custom_call.1} parent=39 // pred_region
          %273 = dma.done [#allocation6], 256
        $region48: #{tpu_custom_call.1} parent=39 // pred_fallthru
          _
        // Predicated region
        $region49: #{tpu_custom_call.1} parent=39 // pred_check
          %p274 = pneg %p112
        $region50: #{tpu_custom_call.1} parent=39 // pred_check_branch
          %276 = sbr.rel (%p274) target = $region52
        $region51: #{tpu_custom_call.1} parent=39 // pred_region
          %277 = dma.done [#allocation6], 256
        $region52: #{tpu_custom_call.1} parent=39 // pred_fallthru
          _
        %s278 = sand.u32 %s36, 1
        %s279 = scalar_lea.sflag [#allocation3], %s278
        %s280 = sand.u32 %s36, 1
        %s281 = smul.addr %s280, 8
        %s282 = scalar_lea.vmem [#allocation2], %s281
        %p283 = pneg %p49
        %p284 = pneg %p46
        %p285 = pneg %p70
        %p286 = pneg %p67
        %p287 = pneg %p91
        %p288 = pneg %p88
        %p289 = pneg %p112
        %p290 = pneg %p109
        %p291 = pneg %p133
        %p292 = pneg %p130
        %p293 = pneg %p159
        %p294 = pneg %p156
        %s295 = sand.u32 %s146, 1
        %s296 = scalar_lea.sflag [#allocation4], %s295
        %s297 = sand.u32 %s146, 1
        %s298 = smul.addr %s297, 8
        %s299 = scalar_lea.vmem [#allocation8], %s298
        %p300 = pneg %p185
        %p301 = pneg %p182
        %s302 = sand.u32 %s172, 1
        %s303 = scalar_lea.sflag [#allocation10], %s302
        %s304 = sand.u32 %s172, 1
        %s305 = smul.addr %s304, 8
        %s306 = scalar_lea.vmem [#allocation9], %s305
        %v308 = vld [vmem:[%s265] sm:$0xff]
        %v309 = vpack.c.bf16 %v308, %v308
        %v310 = vld [vmem:[#allocation5] sm:$0xf]
        %v311 = vld [vmem:[#allocation5 + $0x4] sm:$0xf]
        %v312 = vld [vmem:[#allocation5 + $0x8] sm:$0xf]
        %v313 = vld [vmem:[#allocation5 + $0xc] sm:$0xf]
        %v314 = vld [vmem:[%s2] sm:$0x1]
        %v316 = vlaneseq
        %v317 = vshrl.u32 %v316, 7
        %v318 = vsub.s32 0, %v317
        %v319 = vrot.slane %v314, %v318
        %v325 = vunpack.c.l.b16 %v310
        %v326 = vunpack.c.l.b16 %v311
        %v327 = vunpack.c.l.b16 %v312
        %v328 = vunpack.c.l.b16 %v313
        %v329 = vpack.c.b16 %v326, %v325
        %v330 = vpack.c.b16 %v328, %v327
        %vm333 = vcmask 261120
        %v335 = vsel %vm333, %v309, 0
        %337 = vmatprep.subr.bf16.mxu0 0
        %338 = vmatpush1.bf16.msra.mxu0 0
        %339 = vmatprep.subr.bf16.mxu0 0
        %340 = vmatpush1.bf16.msra.mxu0 0
        %341 = vmatprep.subr.bf16.mxu0 0
        %342 = vmatpush1.bf16.msra.mxu0 0
        %343 = vmatprep.subr.bf16.mxu0 0
        %344 = vmatpush1.bf16.msra.mxu0 0
        %345 = vmatprep.subr.bf16.mxu0 0
        %346 = vmatpush1.bf16.msra.mxu0 0
        %347 = vmatprep.subr.bf16.mxu0 0
        %348 = vmatpush1.bf16.msra.mxu0 0
        %349 = vmatprep.subr.bf16.mxu0 0
        %350 = vmatpush1.bf16.msra.mxu0 %v330
        %351 = vmatprep.subr.bf16.mxu0 0
        %352 = vmatpush1.bf16.msra.mxu0 %v329
        %353 = vmatprep.subr.bf16.mxu0 0
        %354 = vmatpush2.bf16.msra.mxu0 0
        %355 = vmatprep.subr.bf16.mxu0 0
        %356 = vmatpush2.bf16.msra.mxu0 0
        %357 = vmatprep.subr.bf16.mxu0 0
        %358 = vmatpush2.bf16.msra.mxu0 0
        %359 = vmatprep.subr.bf16.mxu0 0
        %360 = vmatpush2.bf16.msra.mxu0 0
        %361 = vmatprep.subr.bf16.mxu0 0
        %362 = vmatpush2.bf16.msra.mxu0 0
        %363 = vmatprep.subr.bf16.mxu0 0
        %364 = vmatpush2.bf16.msra.mxu0 0
        %365 = vmatprep.subr.bf16.mxu0 0
        %366 = vmatpush2.bf16.msra.mxu0 0
        %367 = vmatprep.subr.bf16.mxu0 0
        %368 = vmatpush2.bf16.msra.mxu0 0
        %369 = vmatprep.mubr.bf16.mxu0 0
        %370 = vmatmul.mubr.bf16.gmra.mxu0 %v335
        %v371 = vpop.f32.mrf.mxu0
        %v372 = vadd.f32 %v319, %v371
        %v373 = vpop.f32.mrf.mxu0
        %v374 = vpop.f32.mrf.mxu0
        %v375 = vpop.f32.mrf.mxu0
        %376 = vdwg.mxu0
        %v377 = vpack.c.bf16 %v372, %v372
        %v378 = vld [vmem:[#allocation7] sm:$0xf]
        %v379 = vld [vmem:[#allocation7 + $0x4] sm:$0xf]
        %v380 = vld [vmem:[#allocation7 + $0x8] sm:$0xf]
        %v381 = vld [vmem:[#allocation7 + $0xc] sm:$0xf]
        %383 = vrot.lane.b32.xlu0 %v377, 96
        %v384 = vpop.permute.xlu0 %383
        %vm385 = vcmask 64512
        %v387 = vsel %vm385, %v377, 0
        %v390 = vsel %vm385, %v384, 0
        %392 = vmatprep.subr.bf16.mxu0 0
        %393 = vmatpush1.bf16.xpose.msra.mxu0 0
        %394 = vmatprep.subr.bf16.mxu0 0
        %395 = vmatpush1.bf16.xpose.msra.mxu0 0
        %396 = vmatprep.subr.bf16.mxu0 0
        %397 = vmatpush1.bf16.xpose.msra.mxu0 0
        %398 = vmatprep.subr.bf16.mxu0 0
        %399 = vmatpush1.bf16.xpose.msra.mxu0 0
        %400 = vmatprep.subr.bf16.mxu0 0
        %401 = vmatpush1.bf16.xpose.msra.mxu0 0
        %402 = vmatprep.subr.bf16.mxu0 0
        %403 = vmatpush1.bf16.xpose.msra.mxu0 0
        %404 = vmatprep.subr.bf16.mxu0 0
        %405 = vmatpush1.bf16.xpose.msra.mxu0 0
        %406 = vmatprep.subr.bf16.mxu0 0
        %407 = vmatpush1.bf16.xpose.msra.mxu0 %v390
        %408 = vmatprep.subr.bf16.mxu0 0
        %409 = vmatpush2.bf16.xpose.msra.mxu0 0
        %410 = vmatprep.subr.bf16.mxu0 0
        %411 = vmatpush2.bf16.xpose.msra.mxu0 0
        %412 = vmatprep.subr.bf16.mxu0 0
        %413 = vmatpush2.bf16.xpose.msra.mxu0 0
        %414 = vmatprep.subr.bf16.mxu0 0
        %415 = vmatpush2.bf16.xpose.msra.mxu0 0
        %416 = vmatprep.subr.bf16.mxu0 0
        %417 = vmatpush2.bf16.xpose.msra.mxu0 0
        %418 = vmatprep.subr.bf16.mxu0 0
        %419 = vmatpush2.bf16.xpose.msra.mxu0 0
        %420 = vmatprep.subr.bf16.mxu0 0
        %421 = vmatpush2.bf16.xpose.msra.mxu0 0
        %422 = vmatprep.subr.bf16.mxu0 0
        %423 = vmatpush2.bf16.xpose.msra.mxu0 0
        %424 = vmatprep.mubr.bf16.mxu0 0
        %425 = vmatmul.mubr.bf16.gmra.mxu0 %v387
        %v426 = vpop.f32.mrf.mxu0
        %v427 = vadd.f32 0.0, %v426
        %v428 = vpop.f32.mrf.mxu0
        %v429 = vpop.f32.mrf.mxu0
        %v430 = vpop.f32.mrf.mxu0
        %431 = vdwg.mxu0
        %v432 = vsel %vm385, %v427, -inf
        %433 = vmax.xlane.f32.xlu0 %v432
        %v434 = vpop.xlane.xlu0 %433
        %v435 = vsub.f32 %v427, %v434
        %v436 = vmul.f32 %v435, 1.442695
        %v437 = vpow.pop %v436
        %v438 = vsel %vm385, %v437, 0.0
        %439 = vadd.xlane.f32.xlu0 %v438
        %v440 = vpop.xlane.xlu0 %439
        %v441 = vrcp.pop %v440
        %v442 = vmul.f32 %v437, %v441
        %v443 = vadd.f32 %v442, 0.0
        %v444 = vpack.c.bf16 %v442, %v442
        %445 = vrot.lane.b32.xlu0 %v377, 64
        %v446 = vpop.permute.xlu0 %445
        %v448 = vsel %vm385, %v444, 0
        %vm450 = vcmask 1043456
        %v452 = vsel %vm450, %v446, 0
        %454 = vmatprep.subr.bf16.mxu0 0
        %455 = vmatpush1.bf16.msra.mxu0 0
        %456 = vmatprep.subr.bf16.mxu0 0
        %457 = vmatpush1.bf16.msra.mxu0 0
        %458 = vmatprep.subr.bf16.mxu0 0
        %459 = vmatpush1.bf16.msra.mxu0 0
        %460 = vmatprep.subr.bf16.mxu0 0
        %461 = vmatpush1.bf16.msra.mxu0 0
        %462 = vmatprep.subr.bf16.mxu0 0
        %463 = vmatpush1.bf16.msra.mxu0 0
        %464 = vmatprep.subr.bf16.mxu0 0
        %465 = vmatpush1.bf16.msra.mxu0 0
        %466 = vmatprep.subr.bf16.mxu0 0
        %467 = vmatpush1.bf16.msra.mxu0 0
        %468 = vmatprep.subr.bf16.mxu0 0
        %469 = vmatpush1.bf16.msra.mxu0 %v452
        %470 = vmatprep.subr.bf16.mxu0 0
        %471 = vmatpush2.bf16.msra.mxu0 0
        %472 = vmatprep.subr.bf16.mxu0 0
        %473 = vmatpush2.bf16.msra.mxu0 0
        %474 = vmatprep.subr.bf16.mxu0 0
        %475 = vmatpush2.bf16.msra.mxu0 0
        %476 = vmatprep.subr.bf16.mxu0 0
        %477 = vmatpush2.bf16.msra.mxu0 0
        %478 = vmatprep.subr.bf16.mxu0 0
        %479 = vmatpush2.bf16.msra.mxu0 0
        %480 = vmatprep.subr.bf16.mxu0 0
        %481 = vmatpush2.bf16.msra.mxu0 0
        %482 = vmatprep.subr.bf16.mxu0 0
        %483 = vmatpush2.bf16.msra.mxu0 0
        %484 = vmatprep.subr.bf16.mxu0 0
        %485 = vmatpush2.bf16.msra.mxu0 0
        %486 = vmatprep.mubr.bf16.mxu0 0
        %487 = vmatmul.mubr.bf16.gmra.mxu0 %v448
        %v488 = vpop.f32.mrf.mxu0
        %v489 = vadd.f32 0.0, %v488
        %v490 = vpop.f32.mrf.mxu0
        %v491 = vpop.f32.mrf.mxu0
        %v492 = vpop.f32.mrf.mxu0
        %493 = vdwg.mxu0
        %v494 = vpack.c.bf16 %v489, %v489
        %495 = vrot.lane.b32.xlu0 %v377, 120
        %v496 = vpop.permute.xlu0 %495
        %497 = vrot.lane.b32.xlu0 %v377, 88
        %v498 = vpop.permute.xlu0 %497
        %v500 = vsel %vm385, %v496, 0
        %v503 = vsel %vm385, %v498, 0
        %505 = vmatprep.subr.bf16.mxu0 0
        %506 = vmatpush1.bf16.xpose.msra.mxu0 0
        %507 = vmatprep.subr.bf16.mxu0 0
        %508 = vmatpush1.bf16.xpose.msra.mxu0 0
        %509 = vmatprep.subr.bf16.mxu0 0
        %510 = vmatpush1.bf16.xpose.msra.mxu0 0
        %511 = vmatprep.subr.bf16.mxu0 0
        %512 = vmatpush1.bf16.xpose.msra.mxu0 0
        %513 = vmatprep.subr.bf16.mxu0 0
        %514 = vmatpush1.bf16.xpose.msra.mxu0 0
        %515 = vmatprep.subr.bf16.mxu0 0
        %516 = vmatpush1.bf16.xpose.msra.mxu0 0
        %517 = vmatprep.subr.bf16.mxu0 0
        %518 = vmatpush1.bf16.xpose.msra.mxu0 0
        %519 = vmatprep.subr.bf16.mxu0 0
        %520 = vmatpush1.bf16.xpose.msra.mxu0 %v503
        %521 = vmatprep.subr.bf16.mxu0 0
        %522 = vmatpush2.bf16.xpose.msra.mxu0 0
        %523 = vmatprep.subr.bf16.mxu0 0
        %524 = vmatpush2.bf16.xpose.msra.mxu0 0
        %525 = vmatprep.subr.bf16.mxu0 0
        %526 = vmatpush2.bf16.xpose.msra.mxu0 0
        %527 = vmatprep.subr.bf16.mxu0 0
        %528 = vmatpush2.bf16.xpose.msra.mxu0 0
        %529 = vmatprep.subr.bf16.mxu0 0
        %530 = vmatpush2.bf16.xpose.msra.mxu0 0
        %531 = vmatprep.subr.bf16.mxu0 0
        %532 = vmatpush2.bf16.xpose.msra.mxu0 0
        %533 = vmatprep.subr.bf16.mxu0 0
        %534 = vmatpush2.bf16.xpose.msra.mxu0 0
        %535 = vmatprep.subr.bf16.mxu0 0
        %536 = vmatpush2.bf16.xpose.msra.mxu0 0
        %537 = vmatprep.mubr.bf16.mxu0 0
        %538 = vmatmul.mubr.bf16.gmra.mxu0 %v500
        %v539 = vpop.f32.mrf.mxu0
        %v540 = vadd.f32 0.0, %v539
        %v541 = vpop.f32.mrf.mxu0
        %v542 = vpop.f32.mrf.mxu0
        %v543 = vpop.f32.mrf.mxu0
        %544 = vdwg.mxu0
        %v545 = vsel %vm385, %v540, -inf
        %546 = vmax.xlane.f32.xlu0 %v545
        %v547 = vpop.xlane.xlu0 %546
        %v548 = vsub.f32 %v540, %v547
        %v549 = vmul.f32 %v548, 1.442695
        %v550 = vpow.pop %v549
        %v551 = vsel %vm385, %v550, 0.0
        %552 = vadd.xlane.f32.xlu0 %v551
        %v553 = vpop.xlane.xlu0 %552
        %v554 = vrcp.pop %v553
        %v555 = vmul.f32 %v550, %v554
        %v556 = vadd.f32 %v443, %v555
        %v557 = vpack.c.bf16 %v555, %v555
        %558 = vrot.lane.b32.xlu0 %v377, 56
        %v559 = vpop.permute.xlu0 %558
        %v561 = vsel %vm385, %v557, 0
        %v564 = vsel %vm450, %v559, 0
        %566 = vmatprep.subr.bf16.mxu0 0
        %567 = vmatpush1.bf16.msra.mxu0 0
        %568 = vmatprep.subr.bf16.mxu0 0
        %569 = vmatpush1.bf16.msra.mxu0 0
        %570 = vmatprep.subr.bf16.mxu0 0
        %571 = vmatpush1.bf16.msra.mxu0 0
        %572 = vmatprep.subr.bf16.mxu0 0
        %573 = vmatpush1.bf16.msra.mxu0 0
        %574 = vmatprep.subr.bf16.mxu0 0
        %575 = vmatpush1.bf16.msra.mxu0 0
        %576 = vmatprep.subr.bf16.mxu0 0
        %577 = vmatpush1.bf16.msra.mxu0 0
        %578 = vmatprep.subr.bf16.mxu0 0
        %579 = vmatpush1.bf16.msra.mxu0 0
        %580 = vmatprep.subr.bf16.mxu0 0
        %581 = vmatpush1.bf16.msra.mxu0 %v564
        %582 = vmatprep.subr.bf16.mxu0 0
        %583 = vmatpush2.bf16.msra.mxu0 0
        %584 = vmatprep.subr.bf16.mxu0 0
        %585 = vmatpush2.bf16.msra.mxu0 0
        %586 = vmatprep.subr.bf16.mxu0 0
        %587 = vmatpush2.bf16.msra.mxu0 0
        %588 = vmatprep.subr.bf16.mxu0 0
        %589 = vmatpush2.bf16.msra.mxu0 0
        %590 = vmatprep.subr.bf16.mxu0 0
        %591 = vmatpush2.bf16.msra.mxu0 0
        %592 = vmatprep.subr.bf16.mxu0 0
        %593 = vmatpush2.bf16.msra.mxu0 0
        %594 = vmatprep.subr.bf16.mxu0 0
        %595 = vmatpush2.bf16.msra.mxu0 0
        %596 = vmatprep.subr.bf16.mxu0 0
        %597 = vmatpush2.bf16.msra.mxu0 0
        %598 = vmatprep.mubr.bf16.mxu0 0
        %599 = vmatmul.mubr.bf16.gmra.mxu0 %v561
        %v600 = vpop.f32.mrf.mxu0
        %v601 = vadd.f32 0.0, %v600
        %v602 = vpop.f32.mrf.mxu0
        %v603 = vpop.f32.mrf.mxu0
        %v604 = vpop.f32.mrf.mxu0
        %605 = vdwg.mxu0
        %v606 = vpack.c.bf16 %v601, %v601
        %v608 = vsel %vm385, %v606, 0
        %v611 = vsel %vm450, %v379, 0
        %613 = vmatprep.subr.bf16.mxu0 0
        %614 = vmatpush1.bf16.msra.mxu0 0
        %615 = vmatprep.subr.bf16.mxu0 0
        %616 = vmatpush1.bf16.msra.mxu0 0
        %617 = vmatprep.subr.bf16.mxu0 0
        %618 = vmatpush1.bf16.msra.mxu0 0
        %619 = vmatprep.subr.bf16.mxu0 0
        %620 = vmatpush1.bf16.msra.mxu0 0
        %621 = vmatprep.subr.bf16.mxu0 0
        %622 = vmatpush1.bf16.msra.mxu0 0
        %623 = vmatprep.subr.bf16.mxu0 0
        %624 = vmatpush1.bf16.msra.mxu0 0
        %625 = vmatprep.subr.bf16.mxu0 0
        %626 = vmatpush1.bf16.msra.mxu0 0
        %627 = vmatprep.subr.bf16.mxu0 0
        %628 = vmatpush1.bf16.msra.mxu0 %v611
        %629 = vmatprep.subr.bf16.mxu0 0
        %630 = vmatpush2.bf16.msra.mxu0 0
        %631 = vmatprep.subr.bf16.mxu0 0
        %632 = vmatpush2.bf16.msra.mxu0 0
        %633 = vmatprep.subr.bf16.mxu0 0
        %634 = vmatpush2.bf16.msra.mxu0 0
        %635 = vmatprep.subr.bf16.mxu0 0
        %636 = vmatpush2.bf16.msra.mxu0 0
        %637 = vmatprep.subr.bf16.mxu0 0
        %638 = vmatpush2.bf16.msra.mxu0 0
        %639 = vmatprep.subr.bf16.mxu0 0
        %640 = vmatpush2.bf16.msra.mxu0 0
        %641 = vmatprep.subr.bf16.mxu0 0
        %642 = vmatpush2.bf16.msra.mxu0 0
        %643 = vmatprep.subr.bf16.mxu0 0
        %644 = vmatpush2.bf16.msra.mxu0 0
        %645 = vmatprep.mubr.bf16.mxu0 0
        %646 = vmatmul.mubr.bf16.gmra.mxu0 %v608
        %v647 = vpop.f32.mrf.mxu0
        %v648 = vadd.f32 0.0, %v647
        %v649 = vpop.f32.mrf.mxu0
        %v650 = vpop.f32.mrf.mxu0
        %v651 = vpop.f32.mrf.mxu0
        %652 = vdwg.mxu0
        %v654 = vsel %vm385, %v494, 0
        %v657 = vsel %vm450, %v378, 0
        %659 = vmatprep.subr.bf16.mxu0 0
        %660 = vmatpush1.bf16.msra.mxu0 0
        %661 = vmatprep.subr.bf16.mxu0 0
        %662 = vmatpush1.bf16.msra.mxu0 0
        %663 = vmatprep.subr.bf16.mxu0 0
        %664 = vmatpush1.bf16.msra.mxu0 0
        %665 = vmatprep.subr.bf16.mxu0 0
        %666 = vmatpush1.bf16.msra.mxu0 0
        %667 = vmatprep.subr.bf16.mxu0 0
        %668 = vmatpush1.bf16.msra.mxu0 0
        %669 = vmatprep.subr.bf16.mxu0 0
        %670 = vmatpush1.bf16.msra.mxu0 0
        %671 = vmatprep.subr.bf16.mxu0 0
        %672 = vmatpush1.bf16.msra.mxu0 0
        %673 = vmatprep.subr.bf16.mxu0 0
        %674 = vmatpush1.bf16.msra.mxu0 %v657
        %675 = vmatprep.subr.bf16.mxu0 0
        %676 = vmatpush2.bf16.msra.mxu0 0
        %677 = vmatprep.subr.bf16.mxu0 0
        %678 = vmatpush2.bf16.msra.mxu0 0
        %679 = vmatprep.subr.bf16.mxu0 0
        %680 = vmatpush2.bf16.msra.mxu0 0
        %681 = vmatprep.subr.bf16.mxu0 0
        %682 = vmatpush2.bf16.msra.mxu0 0
        %683 = vmatprep.subr.bf16.mxu0 0
        %684 = vmatpush2.bf16.msra.mxu0 0
        %685 = vmatprep.subr.bf16.mxu0 0
        %686 = vmatpush2.bf16.msra.mxu0 0
        %687 = vmatprep.subr.bf16.mxu0 0
        %688 = vmatpush2.bf16.msra.mxu0 0
        %689 = vmatprep.subr.bf16.mxu0 0
        %690 = vmatpush2.bf16.msra.mxu0 0
        %691 = vmatprep.mubr.bf16.mxu0 0
        %692 = vmatmul.mubr.bf16.gmra.mxu0 %v654
        %v693 = vpop.f32.mrf.mxu0
        %v694 = vadd.f32 %v648, %v693
        %v695 = vpop.f32.mrf.mxu0
        %v696 = vpop.f32.mrf.mxu0
        %v697 = vpop.f32.mrf.mxu0
        %698 = vdwg.mxu0
        %699 = vrot.lane.b32.xlu0 %v377, 112
        %v700 = vpop.permute.xlu0 %699
        %701 = vrot.lane.b32.xlu0 %v377, 80
        %v702 = vpop.permute.xlu0 %701
        %v704 = vsel %vm385, %v700, 0
        %v707 = vsel %vm385, %v702, 0
        %709 = vmatprep.subr.bf16.mxu0 0
        %710 = vmatpush1.bf16.xpose.msra.mxu0 0
        %711 = vmatprep.subr.bf16.mxu0 0
        %712 = vmatpush1.bf16.xpose.msra.mxu0 0
        %713 = vmatprep.subr.bf16.mxu0 0
        %714 = vmatpush1.bf16.xpose.msra.mxu0 0
        %715 = vmatprep.subr.bf16.mxu0 0
        %716 = vmatpush1.bf16.xpose.msra.mxu0 0
        %717 = vmatprep.subr.bf16.mxu0 0
        %718 = vmatpush1.bf16.xpose.msra.mxu0 0
        %719 = vmatprep.subr.bf16.mxu0 0
        %720 = vmatpush1.bf16.xpose.msra.mxu0 0
        %721 = vmatprep.subr.bf16.mxu0 0
        %722 = vmatpush1.bf16.xpose.msra.mxu0 0
        %723 = vmatprep.subr.bf16.mxu0 0
        %724 = vmatpush1.bf16.xpose.msra.mxu0 %v707
        %725 = vmatprep.subr.bf16.mxu0 0
        %726 = vmatpush2.bf16.xpose.msra.mxu0 0
        %727 = vmatprep.subr.bf16.mxu0 0
        %728 = vmatpush2.bf16.xpose.msra.mxu0 0
        %729 = vmatprep.subr.bf16.mxu0 0
        %730 = vmatpush2.bf16.xpose.msra.mxu0 0
        %731 = vmatprep.subr.bf16.mxu0 0
        %732 = vmatpush2.bf16.xpose.msra.mxu0 0
        %733 = vmatprep.subr.bf16.mxu0 0
        %734 = vmatpush2.bf16.xpose.msra.mxu0 0
        %735 = vmatprep.subr.bf16.mxu0 0
        %736 = vmatpush2.bf16.xpose.msra.mxu0 0
        %737 = vmatprep.subr.bf16.mxu0 0
        %738 = vmatpush2.bf16.xpose.msra.mxu0 0
        %739 = vmatprep.subr.bf16.mxu0 0
        %740 = vmatpush2.bf16.xpose.msra.mxu0 0
        %741 = vmatprep.mubr.bf16.mxu0 0
        %742 = vmatmul.mubr.bf16.gmra.mxu0 %v704
        %v743 = vpop.f32.mrf.mxu0
        %v744 = vadd.f32 0.0, %v743
        %v745 = vpop.f32.mrf.mxu0
        %v746 = vpop.f32.mrf.mxu0
        %v747 = vpop.f32.mrf.mxu0
        %748 = vdwg.mxu0
        %v749 = vsel %vm385, %v744, -inf
        %750 = vmax.xlane.f32.xlu0 %v749
        %v751 = vpop.xlane.xlu0 %750
        %v752 = vsub.f32 %v744, %v751
        %v753 = vmul.f32 %v752, 1.442695
        %v754 = vpow.pop %v753
        %v755 = vsel %vm385, %v754, 0.0
        %756 = vadd.xlane.f32.xlu0 %v755
        %v757 = vpop.xlane.xlu0 %756
        %v758 = vrcp.pop %v757
        %v759 = vmul.f32 %v754, %v758
        %v760 = vadd.f32 %v556, %v759
        %v761 = vpack.c.bf16 %v759, %v759
        %762 = vrot.lane.b32.xlu0 %v377, 48
        %v763 = vpop.permute.xlu0 %762
        %v765 = vsel %vm385, %v761, 0
        %v768 = vsel %vm450, %v763, 0
        %770 = vmatprep.subr.bf16.mxu0 0
        %771 = vmatpush1.bf16.msra.mxu0 0
        %772 = vmatprep.subr.bf16.mxu0 0
        %773 = vmatpush1.bf16.msra.mxu0 0
        %774 = vmatprep.subr.bf16.mxu0 0
        %775 = vmatpush1.bf16.msra.mxu0 0
        %776 = vmatprep.subr.bf16.mxu0 0
        %777 = vmatpush1.bf16.msra.mxu0 0
        %778 = vmatprep.subr.bf16.mxu0 0
        %779 = vmatpush1.bf16.msra.mxu0 0
        %780 = vmatprep.subr.bf16.mxu0 0
        %781 = vmatpush1.bf16.msra.mxu0 0
        %782 = vmatprep.subr.bf16.mxu0 0
        %783 = vmatpush1.bf16.msra.mxu0 0
        %784 = vmatprep.subr.bf16.mxu0 0
        %785 = vmatpush1.bf16.msra.mxu0 %v768
        %786 = vmatprep.subr.bf16.mxu0 0
        %787 = vmatpush2.bf16.msra.mxu0 0
        %788 = vmatprep.subr.bf16.mxu0 0
        %789 = vmatpush2.bf16.msra.mxu0 0
        %790 = vmatprep.subr.bf16.mxu0 0
        %791 = vmatpush2.bf16.msra.mxu0 0
        %792 = vmatprep.subr.bf16.mxu0 0
        %793 = vmatpush2.bf16.msra.mxu0 0
        %794 = vmatprep.subr.bf16.mxu0 0
        %795 = vmatpush2.bf16.msra.mxu0 0
        %796 = vmatprep.subr.bf16.mxu0 0
        %797 = vmatpush2.bf16.msra.mxu0 0
        %798 = vmatprep.subr.bf16.mxu0 0
        %799 = vmatpush2.bf16.msra.mxu0 0
        %800 = vmatprep.subr.bf16.mxu0 0
        %801 = vmatpush2.bf16.msra.mxu0 0
        %802 = vmatprep.mubr.bf16.mxu0 0
        %803 = vmatmul.mubr.bf16.gmra.mxu0 %v765
        %v804 = vpop.f32.mrf.mxu0
        %v805 = vadd.f32 0.0, %v804
        %v806 = vpop.f32.mrf.mxu0
        %v807 = vpop.f32.mrf.mxu0
        %v808 = vpop.f32.mrf.mxu0
        %809 = vdwg.mxu0
        %v810 = vpack.c.bf16 %v805, %v805
        %v812 = vsel %vm385, %v810, 0
        %v815 = vsel %vm450, %v380, 0
        %817 = vmatprep.subr.bf16.mxu0 0
        %818 = vmatpush1.bf16.msra.mxu0 0
        %819 = vmatprep.subr.bf16.mxu0 0
        %820 = vmatpush1.bf16.msra.mxu0 0
        %821 = vmatprep.subr.bf16.mxu0 0
        %822 = vmatpush1.bf16.msra.mxu0 0
        %823 = vmatprep.subr.bf16.mxu0 0
        %824 = vmatpush1.bf16.msra.mxu0 0
        %825 = vmatprep.subr.bf16.mxu0 0
        %826 = vmatpush1.bf16.msra.mxu0 0
        %827 = vmatprep.subr.bf16.mxu0 0
        %828 = vmatpush1.bf16.msra.mxu0 0
        %829 = vmatprep.subr.bf16.mxu0 0
        %830 = vmatpush1.bf16.msra.mxu0 0
        %831 = vmatprep.subr.bf16.mxu0 0
        %832 = vmatpush1.bf16.msra.mxu0 %v815
        %833 = vmatprep.subr.bf16.mxu0 0
        %834 = vmatpush2.bf16.msra.mxu0 0
        %835 = vmatprep.subr.bf16.mxu0 0
        %836 = vmatpush2.bf16.msra.mxu0 0
        %837 = vmatprep.subr.bf16.mxu0 0
        %838 = vmatpush2.bf16.msra.mxu0 0
        %839 = vmatprep.subr.bf16.mxu0 0
        %840 = vmatpush2.bf16.msra.mxu0 0
        %841 = vmatprep.subr.bf16.mxu0 0
        %842 = vmatpush2.bf16.msra.mxu0 0
        %843 = vmatprep.subr.bf16.mxu0 0
        %844 = vmatpush2.bf16.msra.mxu0 0
        %845 = vmatprep.subr.bf16.mxu0 0
        %846 = vmatpush2.bf16.msra.mxu0 0
        %847 = vmatprep.subr.bf16.mxu0 0
        %848 = vmatpush2.bf16.msra.mxu0 0
        %849 = vmatprep.mubr.bf16.mxu0 0
        %850 = vmatmul.mubr.bf16.gmra.mxu0 %v812
        %v851 = vpop.f32.mrf.mxu0
        %v852 = vadd.f32 0.0, %v851
        %v853 = vpop.f32.mrf.mxu0
        %v854 = vpop.f32.mrf.mxu0
        %v855 = vpop.f32.mrf.mxu0
        %856 = vdwg.mxu0
        %v857 = vadd.f32 %v694, %v852
        %858 = vrot.lane.b32.xlu0 %v377, 104
        %v859 = vpop.permute.xlu0 %858
        %860 = vrot.lane.b32.xlu0 %v377, 72
        %v861 = vpop.permute.xlu0 %860
        %v863 = vsel %vm385, %v859, 0
        %v866 = vsel %vm385, %v861, 0
        %868 = vmatprep.subr.bf16.mxu0 0
        %869 = vmatpush1.bf16.xpose.msra.mxu0 0
        %870 = vmatprep.subr.bf16.mxu0 0
        %871 = vmatpush1.bf16.xpose.msra.mxu0 0
        %872 = vmatprep.subr.bf16.mxu0 0
        %873 = vmatpush1.bf16.xpose.msra.mxu0 0
        %874 = vmatprep.subr.bf16.mxu0 0
        %875 = vmatpush1.bf16.xpose.msra.mxu0 0
        %876 = vmatprep.subr.bf16.mxu0 0
        %877 = vmatpush1.bf16.xpose.msra.mxu0 0
        %878 = vmatprep.subr.bf16.mxu0 0
        %879 = vmatpush1.bf16.xpose.msra.mxu0 0
        %880 = vmatprep.subr.bf16.mxu0 0
        %881 = vmatpush1.bf16.xpose.msra.mxu0 0
        %882 = vmatprep.subr.bf16.mxu0 0
        %883 = vmatpush1.bf16.xpose.msra.mxu0 %v866
        %884 = vmatprep.subr.bf16.mxu0 0
        %885 = vmatpush2.bf16.xpose.msra.mxu0 0
        %886 = vmatprep.subr.bf16.mxu0 0
        %887 = vmatpush2.bf16.xpose.msra.mxu0 0
        %888 = vmatprep.subr.bf16.mxu0 0
        %889 = vmatpush2.bf16.xpose.msra.mxu0 0
        %890 = vmatprep.subr.bf16.mxu0 0
        %891 = vmatpush2.bf16.xpose.msra.mxu0 0
        %892 = vmatprep.subr.bf16.mxu0 0
        %893 = vmatpush2.bf16.xpose.msra.mxu0 0
        %894 = vmatprep.subr.bf16.mxu0 0
        %895 = vmatpush2.bf16.xpose.msra.mxu0 0
        %896 = vmatprep.subr.bf16.mxu0 0
        %897 = vmatpush2.bf16.xpose.msra.mxu0 0
        %898 = vmatprep.subr.bf16.mxu0 0
        %899 = vmatpush2.bf16.xpose.msra.mxu0 0
        %900 = vmatprep.mubr.bf16.mxu0 0
        %901 = vmatmul.mubr.bf16.gmra.mxu0 %v863
        %v902 = vpop.f32.mrf.mxu0
        %v903 = vadd.f32 0.0, %v902
        %v904 = vpop.f32.mrf.mxu0
        %v905 = vpop.f32.mrf.mxu0
        %v906 = vpop.f32.mrf.mxu0
        %907 = vdwg.mxu0
        %v908 = vsel %vm385, %v903, -inf
        %909 = vmax.xlane.f32.xlu0 %v908
        %v910 = vpop.xlane.xlu0 %909
        %v911 = vsub.f32 %v903, %v910
        %v912 = vmul.f32 %v911, 1.442695
        %v913 = vpow.pop %v912
        %v914 = vsel %vm385, %v913, 0.0
        %915 = vadd.xlane.f32.xlu0 %v914
        %v916 = vpop.xlane.xlu0 %915
        %v917 = vrcp.pop %v916
        %v918 = vmul.f32 %v913, %v917
        %v919 = vadd.f32 %v760, %v918
        %v920 = vpack.c.bf16 %v918, %v918
        %921 = vrot.lane.b32.xlu0 %v377, 40
        %v922 = vpop.permute.xlu0 %921
        %v924 = vsel %vm385, %v920, 0
        %v927 = vsel %vm450, %v922, 0
        %929 = vmatprep.subr.bf16.mxu0 0
        %930 = vmatpush1.bf16.msra.mxu0 0
        %931 = vmatprep.subr.bf16.mxu0 0
        %932 = vmatpush1.bf16.msra.mxu0 0
        %933 = vmatprep.subr.bf16.mxu0 0
        %934 = vmatpush1.bf16.msra.mxu0 0
        %935 = vmatprep.subr.bf16.mxu0 0
        %936 = vmatpush1.bf16.msra.mxu0 0
        %937 = vmatprep.subr.bf16.mxu0 0
        %938 = vmatpush1.bf16.msra.mxu0 0
        %939 = vmatprep.subr.bf16.mxu0 0
        %940 = vmatpush1.bf16.msra.mxu0 0
        %941 = vmatprep.subr.bf16.mxu0 0
        %942 = vmatpush1.bf16.msra.mxu0 0
        %943 = vmatprep.subr.bf16.mxu0 0
        %944 = vmatpush1.bf16.msra.mxu0 %v927
        %945 = vmatprep.subr.bf16.mxu0 0
        %946 = vmatpush2.bf16.msra.mxu0 0
        %947 = vmatprep.subr.bf16.mxu0 0
        %948 = vmatpush2.bf16.msra.mxu0 0
        %949 = vmatprep.subr.bf16.mxu0 0
        %950 = vmatpush2.bf16.msra.mxu0 0
        %951 = vmatprep.subr.bf16.mxu0 0
        %952 = vmatpush2.bf16.msra.mxu0 0
        %953 = vmatprep.subr.bf16.mxu0 0
        %954 = vmatpush2.bf16.msra.mxu0 0
        %955 = vmatprep.subr.bf16.mxu0 0
        %956 = vmatpush2.bf16.msra.mxu0 0
        %957 = vmatprep.subr.bf16.mxu0 0
        %958 = vmatpush2.bf16.msra.mxu0 0
        %959 = vmatprep.subr.bf16.mxu0 0
        %960 = vmatpush2.bf16.msra.mxu0 0
        %961 = vmatprep.mubr.bf16.mxu0 0
        %962 = vmatmul.mubr.bf16.gmra.mxu0 %v924
        %v963 = vpop.f32.mrf.mxu0
        %v964 = vadd.f32 0.0, %v963
        %v965 = vpop.f32.mrf.mxu0
        %v966 = vpop.f32.mrf.mxu0
        %v967 = vpop.f32.mrf.mxu0
        %968 = vdwg.mxu0
        %v969 = vpack.c.bf16 %v964, %v964
        %v971 = vsel %vm385, %v969, 0
        %v974 = vsel %vm450, %v381, 0
        %976 = vmatprep.subr.bf16.mxu0 0
        %977 = vmatpush1.bf16.msra.mxu0 0
        %978 = vmatprep.subr.bf16.mxu0 0
        %979 = vmatpush1.bf16.msra.mxu0 0
        %980 = vmatprep.subr.bf16.mxu0 0
        %981 = vmatpush1.bf16.msra.mxu0 0
        %982 = vmatprep.subr.bf16.mxu0 0
        %983 = vmatpush1.bf16.msra.mxu0 0
        %984 = vmatprep.subr.bf16.mxu0 0
        %985 = vmatpush1.bf16.msra.mxu0 0
        %986 = vmatprep.subr.bf16.mxu0 0
        %987 = vmatpush1.bf16.msra.mxu0 0
        %988 = vmatprep.subr.bf16.mxu0 0
        %989 = vmatpush1.bf16.msra.mxu0 0
        %990 = vmatprep.subr.bf16.mxu0 0
        %991 = vmatpush1.bf16.msra.mxu0 %v974
        %992 = vmatprep.subr.bf16.mxu0 0
        %993 = vmatpush2.bf16.msra.mxu0 0
        %994 = vmatprep.subr.bf16.mxu0 0
        %995 = vmatpush2.bf16.msra.mxu0 0
        %996 = vmatprep.subr.bf16.mxu0 0
        %997 = vmatpush2.bf16.msra.mxu0 0
        %998 = vmatprep.subr.bf16.mxu0 0
        %999 = vmatpush2.bf16.msra.mxu0 0
        %1000 = vmatprep.subr.bf16.mxu0 0
        %1001 = vmatpush2.bf16.msra.mxu0 0
        %1002 = vmatprep.subr.bf16.mxu0 0
        %1003 = vmatpush2.bf16.msra.mxu0 0
        %1004 = vmatprep.subr.bf16.mxu0 0
        %1005 = vmatpush2.bf16.msra.mxu0 0
        %1006 = vmatprep.subr.bf16.mxu0 0
        %1007 = vmatpush2.bf16.msra.mxu0 0
        %1008 = vmatprep.mubr.bf16.mxu0 0
        %1009 = vmatmul.mubr.bf16.gmra.mxu0 %v971
        %v1010 = vpop.f32.mrf.mxu0
        %v1011 = vadd.f32 0.0, %v1010
        %v1012 = vpop.f32.mrf.mxu0
        %v1013 = vpop.f32.mrf.mxu0
        %v1014 = vpop.f32.mrf.mxu0
        %1015 = vdwg.mxu0
        %v1016 = vadd.f32 %v857, %v1011
        %v1017 = vld [vmem:[%s4] sm:$0x1]
        %v1019 = vlaneseq
        %v1020 = vshrl.u32 %v1019, 7
        %v1021 = vsub.s32 0, %v1020
        %v1022 = vrot.slane %v1017, %v1021
        %v1024 = vadd.f32 %v1016, %v1022
        %1025 = vst.msk [vmem:[%s299] sm:$0xff] %vm333, %v1024
        %v1026 = vmul.f32 %v919, 0.25
        %1027 = vst.msk [vmem:[%s306] sm:$0xff] %vm385, %v1026
        %s1028 = sand.u32 %s146, 1
        %s1029 = scalar_lea.sflag [#allocation4], %s1028
        %s1030 = sand.u32 %s146, 1
        %s1031 = smul.addr %s1030, 8
        %s1032 = scalar_lea.vmem [#allocation8], %s1031
        %s1033 = sand.u32 %s172, 1
        %s1034 = scalar_lea.sflag [#allocation10], %s1033
        %s1035 = sand.u32 %s172, 1
        %s1036 = smul.addr %s1035, 8
        %s1037 = scalar_lea.vmem [#allocation9], %s1036
        // Predicated region
        $region53: #{tpu_custom_call.1} parent=39 // pred_check
          %p1038 = pneg %p156
        $region54: #{tpu_custom_call.1} parent=39 // pred_check_branch
          %1040 = sbr.rel (%p1038) target = $region56
        $region55: #{tpu_custom_call.1} parent=39 // pred_region
          %s1042 = ssub.s32 128, 128
          %1043 = vsyncadd %s1029, %s1042
          %s1044 = smul.addr %s28, 128
          %s1045 = scalar_lea.hbm %s5, %s1044
          %s1047 = sshll.u32 %s1032, 4
          %s1048 = int_to_ptr.vmem [resolvable:$true] %s1047
          %1050 = dma.vmem_to_hbm [thread:$0]  %s1048, 128, %s1045, %s1029
        $region56: #{tpu_custom_call.1} parent=39 // pred_fallthru
          _
        // Predicated region
        $region57: #{tpu_custom_call.1} parent=39 // pred_check
          %p1051 = pneg %p182
        $region58: #{tpu_custom_call.1} parent=39 // pred_check_branch
          %1053 = sbr.rel (%p1051) target = $region60
        $region59: #{tpu_custom_call.1} parent=39 // pred_region
          %s1055 = ssub.s32 128, 128
          %1056 = vsyncadd %s1034, %s1055
          %s1057 = smul.addr %s28, 128
          %s1058 = scalar_lea.hbm %s6, %s1057
          %s1060 = sshll.u32 %s1037, 4
          %s1061 = int_to_ptr.vmem [resolvable:$true] %s1060
          %1063 = dma.vmem_to_hbm [thread:$0]  %s1061, 128, %s1058, %s1034
        $region60: #{tpu_custom_call.1} parent=39 // pred_fallthru
          _
      $region40: #{tpu_custom_call.1} parent=5 // pred_fallthru
        _
      %p1064 = scmp.le.s32.totalorder 2, %s23
      // Predicated region
      $region61: #{tpu_custom_call.1} parent=5 // pred_check
        %p1065 = pneg %p1064
      $region62: #{tpu_custom_call.1} parent=5 // pred_check_branch
        %1067 = sbr.rel (%p1065) target = $region64
      $region63: #{tpu_custom_call.1} parent=5 // pred_region
        %s1068 = ssub.s32 %s23, 2
        // Predicated region
        $region65: #{tpu_custom_call.1} parent=63 // pred_check
          %p1069 = pneg %p162
        $region66: #{tpu_custom_call.1} parent=63 // pred_check_branch
          %1071 = sbr.rel (%p1069) target = $region68
        $region67: #{tpu_custom_call.1} parent=63 // pred_region
          %s1072 = sand.u32 %s147, 1
          %s1073 = scalar_lea.sflag [#allocation4], %s1072
          %s1074 = sand.u32 %s147, 1
          %s1075 = smul.addr %s1074, 8
          %s1076 = scalar_lea.vmem [#allocation8], %s1075
          %1077 = dma.done %s1073, 128
        $region68: #{tpu_custom_call.1} parent=63 // pred_fallthru
          _
        // Predicated region
        $region69: #{tpu_custom_call.1} parent=63 // pred_check
          %p1078 = pneg %p188
        $region70: #{tpu_custom_call.1} parent=63 // pred_check_branch
          %1080 = sbr.rel (%p1078) target = $region72
        $region71: #{tpu_custom_call.1} parent=63 // pred_region
          %s1081 = sand.u32 %s173, 1
          %s1082 = scalar_lea.sflag [#allocation10], %s1081
          %s1083 = sand.u32 %s173, 1
          %s1084 = smul.addr %s1083, 8
          %s1085 = scalar_lea.vmem [#allocation9], %s1084
          %1086 = dma.done %s1082, 128
        $region72: #{tpu_custom_call.1} parent=63 // pred_fallthru
          _
      $region64: #{tpu_custom_call.1} parent=5 // pred_fallthru
        _
    $region6: #{tpu_custom_call.1} parent=1 // loop_footer
      %s27 = sadd.s32 1, %s23
    $region7: #{tpu_custom_call.1} parent=1 // loop_footer_branch
      %22 = sbr.rel target = $region3
    $region8: #{tpu_custom_call.1} parent=1 // loop_exit
      _
    %1087 = vsyncpa [#allocation3], 1
    %s1088 = scalar_lea.sflag [#allocation3], 1
    %1089 = vsyncpa %s1088, 1
    %1090 = vsyncpa [#allocation6], 1
    %1091 = vsyncpa [#allocation4], 1
    %s1092 = scalar_lea.sflag [#allocation4], 1
    %1093 = vsyncpa %s1092, 1
    %1094 = vsyncpa [#allocation10], 1
    %s1095 = scalar_lea.sflag [#allocation10], 1
    %1096 = vsyncpa %s1095, 1

</llo_original>
